<compile_context>
chip_gen: v7x
topology: tpu7x:2x2x1
jax: 0.10.0
libtpu: 0.0.40
codegen_flags: <defaults>
</compile_context>

<pallas_src>
import functools

import jax
import jax.numpy as jnp
from jax import lax
from jax.experimental import pallas as pl
from jax.experimental.pallas import tpu as pltpu

_LANES = 128
_SUBLANES = 8
_ALIGN = _LANES * _SUBLANES   # 1024 elements: copy-free path when n % 1024 == 0
_TM_TARGET = 4096             # rows per block: (4096, 128) f32 block = 2 MiB


def _mix32(v):
    """splitmix32/lowbias32 finalizer: uint32 -> well-mixed uint32 (VPU-only ops)."""
    v = v ^ (v >> 16)
    v = v * jnp.uint32(0x7FEB352D)
    v = v ^ (v >> 15)
    v = v * jnp.uint32(0x846CA68B)
    v = v ^ (v >> 16)
    return v


def _bits_to_unit_float(bits):
    """uint32 bits -> f32 in [1, 2) via exponent trick (no int->float convert)."""
    return lax.bitcast_convert_type((bits >> 9) | jnp.uint32(0x3F800000), jnp.float32)


def _mult_gauss_noise_kernel(seed_ref, x_ref, o_ref, *, sigma):
    tm = x_ref.shape[0]
    half = tm // 2                      # tm is always even (multiple of 8)

    # --- stateless counter-based random bits: one pair-index per 2 outputs ---
    row = lax.broadcasted_iota(jnp.int32, (half, _LANES), 0).astype(jnp.uint32)
    col = lax.broadcasted_iota(jnp.int32, (half, _LANES), 1).astype(jnp.uint32)
    pid = pl.program_id(0).astype(jnp.uint32)
    idx = pid * jnp.uint32(half * _LANES) + row * jnp.uint32(_LANES) + col

    # Seed mixed multiplicatively before the hash -> no (seed, block) stream
    # collisions of the "seed + program_id" kind.
    seed_u = seed_ref[0].astype(jnp.uint32)
    key = seed_u * jnp.uint32(0x9E3779B9) + jnp.uint32(0x7F4A7C15)
    h = _mix32(idx ^ key)                           # stream 1 bits
    g = _mix32(h ^ jnp.uint32(0x85EBCA6B))          # stream 2 bits

    # --- Box-Muller, using both outputs (halves transcendental + bit volume) ---
    u1 = 2.0 - _bits_to_unit_float(h)               # uniform on (0, 1]; log-safe
    u2 = _bits_to_unit_float(g) - 1.0               # uniform on [0, 1)
    r_s = jnp.float32(sigma) * jnp.sqrt(-2.0 * jnp.log(u1))   # sigma folded in once
    theta = jnp.float32(6.283185307179586) * u2               # 2*pi*u2

    # Write each Box-Muller half directly (no concatenate / extra VMEM slab).
    xa = x_ref[:half, :].astype(jnp.float32)
    xb = x_ref[half:, :].astype(jnp.float32)
    o_ref[:half, :] = (xa * (1.0 + r_s * jnp.cos(theta))).astype(o_ref.dtype)
    o_ref[half:, :] = (xb * (1.0 + r_s * jnp.sin(theta))).astype(o_ref.dtype)


def weight_multiplicative_gaussian_noise(
    x, sigma: float, seed: int = 0, *, enabled: bool = True, training: bool = True
):
    """JAX/Pallas equivalent of WeightMultiplicativeGaussianNoiseLayer.forward."""
    assert sigma >= 0.0, f"sigma must be non-negative, but got {sigma}"
    if x is None or not enabled or not training:
        return x

    orig_shape = x.shape
    orig_dtype = x.dtype
    n = x.size
    if n == 0:
        return x

    flat = x.reshape(-1)
    pad = (-n) % _ALIGN
    if pad:
        # TODO(synk): ragged sizes still pay a pad+slice copy; aligned weight
        # tensors (n % 1024 == 0, the common case) take the copy-free path.
        flat = jnp.pad(flat, (0, pad))
    rows = (n + pad) // _LANES          # always a multiple of 8 (hence even)
    x2d = flat.reshape(rows, _LANES)

    tm = rows if rows <= _TM_TARGET else _TM_TARGET
    grid = (pl.cdiv(rows, tm),)         # partial last block handled by Pallas masking

    seed_arr = jnp.asarray([seed], dtype=jnp.int32)
    kernel = functools.partial(_mult_gauss_noise_kernel, sigma=float(sigma))

    cost = pl.CostEstimate(
        flops=40 * n,                       # hash + Box-Muller VPU work (rough)
        transcendentals=2 * n,              # log/sqrt + cos|sin per element
        bytes_accessed=2 * n * x.dtype.itemsize,
    )

    out2d = pl.pallas_call(
        kernel,
        out_shape=jax.ShapeDtypeStruct((rows, _LANES), orig_dtype),
        grid_spec=pltpu.PrefetchScalarGridSpec(
            num_scalar_prefetch=1,
            grid=grid,
            in_specs=[pl.BlockSpec((tm, _LANES), lambda i, seed_ref: (i, 0))],
            out_specs=pl.BlockSpec((tm, _LANES), lambda i, seed_ref: (i, 0)),
        ),
        compiler_params=pltpu.CompilerParams(
            dimension_semantics=("parallel",),   # stateless noise -> megacore-safe
        ),
        cost_estimate=cost,
    )(seed_arr, x2d)

    out_flat = out2d.reshape(-1)
    if pad:
        out_flat = out_flat[:n]
    return out_flat.reshape(orig_shape)


if __name__ == "__main__":
    key = jax.random.PRNGKey(0)
    # Small synthetic "weight" tensor (conv-weight-like), n = 2048 (aligned path).
    x = jax.random.normal(key, (2, 4, 16, 16), dtype=jnp.float32)
    sigma = 0.1

    # enabled + training: multiplicative Gaussian noise applied in-kernel
    y = weight_multiplicative_gaussian_noise(x, sigma, seed=0, enabled=True, training=True)
    y = jax.block_until_ready(y)
    assert y.shape == x.shape and y.dtype == x.dtype
    assert bool(jnp.all(jnp.isfinite(y)))

    # sanity: the multiplicative factor y/x hovers around 1 with std ~ sigma
    safe_x = jnp.where(x == 0, 1.0, x)
    factor = y / safe_x
    assert abs(float(jnp.mean(factor)) - 1.0) < 0.05
    assert abs(float(jnp.std(factor)) - sigma) < 0.05

    # different seed -> different noise
    y2 = weight_multiplicative_gaussian_noise(x, sigma, seed=1, enabled=True, training=True)
    assert not jnp.array_equal(y, y2)

    # multi-block path: fc-weight-like matrix, rows = 8192 -> grid of 2 full blocks
    xw = jax.random.normal(jax.random.PRNGKey(2), (1024, 1024), dtype=jnp.float32)
    yw = jax.block_until_ready(
        weight_multiplicative_gaussian_noise(xw, sigma, seed=3, enabled=True, training=True)
    )
    fw = yw / jnp.where(xw == 0, 1.0, xw)
    assert bool(jnp.all(jnp.isfinite(yw)))
    assert abs(float(jnp.mean(fw)) - 1.0) < 0.01
    assert abs(float(jnp.std(fw)) - sigma) < 0.01

    # bf16 weights exercise the packed-tile load/store path
    xb = x.astype(jnp.bfloat16)
    yb = jax.block_until_ready(
        weight_multiplicative_gaussian_noise(xb, sigma, seed=0, enabled=True, training=True)
    )
    assert yb.shape == xb.shape and yb.dtype == xb.dtype

    # ragged size exercises the pad + slice fallback path
    xr = jax.random.normal(jax.random.PRNGKey(1), (3, 5, 7), dtype=jnp.float32)
    yr = jax.block_until_ready(
        weight_multiplicative_gaussian_noise(xr, sigma, seed=0, enabled=True, training=True)
    )
    assert yr.shape == xr.shape and bool(jnp.all(jnp.isfinite(yr)))

    # disabled / eval path: identity passthrough
    y_eval = weight_multiplicative_gaussian_noise(x, sigma, seed=0, enabled=True, training=False)
    assert jnp.array_equal(y_eval, x)
    y_off = weight_multiplicative_gaussian_noise(x, sigma, seed=0, enabled=False, training=True)
    assert jnp.array_equal(y_off, x)

    print("KERNEL_OK")
</pallas_src>

<mosaic_0001>
module attributes {stable_mosaic.version = 11 : i64} {
  func.func @_mult_gauss_noise_kernel(%arg0: i32, %arg1: memref<1xi32, #tpu.memory_space<smem>>, %arg2: memref<16x128xf32, #tpu.memory_space<vmem>>, %arg3: memref<16x128xf32, #tpu.memory_space<vmem>>) attributes {dimension_semantics = [#tpu.dimension_semantics<parallel>], iteration_bounds = array<i64: 1>, scalar_prefetch = 1 : i64, scratch_operands = 0 : i64, tpu.core_type = #tpu.core_type<tc>, window_params = [{transform_indices = @transform_0, window_bounds = array<i64: 16, 128>}, {transform_indices = @transform_1, window_bounds = array<i64: 16, 128>}]} {
    %0 = tpu.iota {dimensions = array<i32: 0>} : vector<8x128xi32>
    %1 = tpu.iota {dimensions = array<i32: 1>} : vector<8x128xi32>
    %c1024_i32 = arith.constant 1024 : i32
    %2 = arith.muli %arg0, %c1024_i32 : i32
    %c128_i32 = arith.constant 128 : i32
    %3 = vector.broadcast %c128_i32 : i32 to vector<8x128xi32>
    %4 = arith.muli %0, %3 : vector<8x128xi32>
    %5 = vector.broadcast %2 : i32 to vector<8x128xi32>
    %6 = arith.addi %5, %4 : vector<8x128xi32>
    %7 = arith.addi %6, %1 : vector<8x128xi32>
    %c0 = arith.constant 0 : index
    %8 = memref.load %arg1[%c0] : memref<1xi32, #tpu.memory_space<smem>>
    %c-1640531527_i32 = arith.constant -1640531527 : i32
    %9 = arith.muli %8, %c-1640531527_i32 : i32
    %c2135587861_i32 = arith.constant 2135587861 : i32
    %10 = arith.addi %9, %c2135587861_i32 : i32
    %11 = vector.broadcast %10 : i32 to vector<8x128xi32>
    %12 = arith.xori %7, %11 : vector<8x128xi32>
    %c16_i32 = arith.constant 16 : i32
    %13 = vector.broadcast %c16_i32 : i32 to vector<8x128xi32>
    %14 = arith.shrui %12, %13 : vector<8x128xi32>
    %15 = arith.xori %12, %14 : vector<8x128xi32>
    %c2146121005_i32 = arith.constant 2146121005 : i32
    %16 = vector.broadcast %c2146121005_i32 : i32 to vector<8x128xi32>
    %17 = arith.muli %15, %16 : vector<8x128xi32>
    %c15_i32 = arith.constant 15 : i32
    %18 = vector.broadcast %c15_i32 : i32 to vector<8x128xi32>
    %19 = arith.shrui %17, %18 : vector<8x128xi32>
    %20 = arith.xori %17, %19 : vector<8x128xi32>
    %c-2073254261_i32 = arith.constant -2073254261 : i32
    %21 = vector.broadcast %c-2073254261_i32 : i32 to vector<8x128xi32>
    %22 = arith.muli %20, %21 : vector<8x128xi32>
    %c16_i32_0 = arith.constant 16 : i32
    %23 = vector.broadcast %c16_i32_0 : i32 to vector<8x128xi32>
    %24 = arith.shrui %22, %23 : vector<8x128xi32>
    %25 = arith.xori %22, %24 : vector<8x128xi32>
    %c-2048144789_i32 = arith.constant -2048144789 : i32
    %26 = vector.broadcast %c-2048144789_i32 : i32 to vector<8x128xi32>
    %27 = arith.xori %25, %26 : vector<8x128xi32>
    %c16_i32_1 = arith.constant 16 : i32
    %28 = vector.broadcast %c16_i32_1 : i32 to vector<8x128xi32>
    %29 = arith.shrui %27, %28 : vector<8x128xi32>
    %30 = arith.xori %27, %29 : vector<8x128xi32>
    %c2146121005_i32_2 = arith.constant 2146121005 : i32
    %31 = vector.broadcast %c2146121005_i32_2 : i32 to vector<8x128xi32>
    %32 = arith.muli %30, %31 : vector<8x128xi32>
    %c15_i32_3 = arith.constant 15 : i32
    %33 = vector.broadcast %c15_i32_3 : i32 to vector<8x128xi32>
    %34 = arith.shrui %32, %33 : vector<8x128xi32>
    %35 = arith.xori %32, %34 : vector<8x128xi32>
    %c-2073254261_i32_4 = arith.constant -2073254261 : i32
    %36 = vector.broadcast %c-2073254261_i32_4 : i32 to vector<8x128xi32>
    %37 = arith.muli %35, %36 : vector<8x128xi32>
    %c16_i32_5 = arith.constant 16 : i32
    %38 = vector.broadcast %c16_i32_5 : i32 to vector<8x128xi32>
    %39 = arith.shrui %37, %38 : vector<8x128xi32>
    %40 = arith.xori %37, %39 : vector<8x128xi32>
    %c9_i32 = arith.constant 9 : i32
    %41 = vector.broadcast %c9_i32 : i32 to vector<8x128xi32>
    %42 = arith.shrui %25, %41 : vector<8x128xi32>
    %c1065353216_i32 = arith.constant 1065353216 : i32
    %43 = vector.broadcast %c1065353216_i32 : i32 to vector<8x128xi32>
    %44 = arith.ori %42, %43 : vector<8x128xi32>
    %45 = tpu.bitcast %44 : vector<8x128xi32> -> vector<8x128xf32>
    %cst = arith.constant 2.000000e+00 : f32
    %46 = vector.broadcast %cst : f32 to vector<8x128xf32>
    %47 = arith.subf %46, %45 : vector<8x128xf32>
    %c9_i32_6 = arith.constant 9 : i32
    %48 = vector.broadcast %c9_i32_6 : i32 to vector<8x128xi32>
    %49 = arith.shrui %40, %48 : vector<8x128xi32>
    %c1065353216_i32_7 = arith.constant 1065353216 : i32
    %50 = vector.broadcast %c1065353216_i32_7 : i32 to vector<8x128xi32>
    %51 = arith.ori %49, %50 : vector<8x128xi32>
    %52 = tpu.bitcast %51 : vector<8x128xi32> -> vector<8x128xf32>
    %cst_8 = arith.constant 1.000000e+00 : f32
    %53 = vector.broadcast %cst_8 : f32 to vector<8x128xf32>
    %54 = arith.subf %52, %53 : vector<8x128xf32>
    %55 = math.log %47 : vector<8x128xf32>
    %cst_9 = arith.constant -2.000000e+00 : f32
    %56 = vector.broadcast %cst_9 : f32 to vector<8x128xf32>
    %57 = arith.mulf %56, %55 : vector<8x128xf32>
    %58 = math.sqrt %57 : vector<8x128xf32>
    %cst_10 = arith.constant 1.000000e-01 : f32
    %59 = vector.broadcast %cst_10 : f32 to vector<8x128xf32>
    %60 = arith.mulf %59, %58 : vector<8x128xf32>
    %cst_11 = arith.constant 6.28318548 : f32
    %61 = vector.broadcast %cst_11 : f32 to vector<8x128xf32>
    %62 = arith.mulf %61, %54 : vector<8x128xf32>
    %c0_12 = arith.constant 0 : index
    %c0_13 = arith.constant 0 : index
    %63 = vector.load %arg2[%c0_12, %c0_13] : memref<16x128xf32, #tpu.memory_space<vmem>>, vector<8x128xf32>
    %c8 = arith.constant 8 : index
    %c0_14 = arith.constant 0 : index
    %64 = vector.load %arg2[%c8, %c0_14] : memref<16x128xf32, #tpu.memory_space<vmem>>, vector<8x128xf32>
    %65 = math.cos %62 : vector<8x128xf32>
    %66 = arith.mulf %60, %65 : vector<8x128xf32>
    %cst_15 = arith.constant 1.000000e+00 : f32
    %67 = vector.broadcast %cst_15 : f32 to vector<8x128xf32>
    %68 = arith.addf %67, %66 : vector<8x128xf32>
    %69 = arith.mulf %63, %68 : vector<8x128xf32>
    %c0_16 = arith.constant 0 : index
    %c0_17 = arith.constant 0 : index
    %70 = vector.load %arg3[%c0_16, %c0_17] : memref<16x128xf32, #tpu.memory_space<vmem>>, vector<8x128xf32>
    tpu.vector_store %arg3[%c0_16, %c0_17], %69 {strides = array<i32>} : memref<16x128xf32, #tpu.memory_space<vmem>>, vector<8x128xf32>,
    %71 = math.sin %62 : vector<8x128xf32>
    %72 = arith.mulf %60, %71 : vector<8x128xf32>
    %cst_18 = arith.constant 1.000000e+00 : f32
    %73 = vector.broadcast %cst_18 : f32 to vector<8x128xf32>
    %74 = arith.addf %73, %72 : vector<8x128xf32>
    %75 = arith.mulf %64, %74 : vector<8x128xf32>
    %c8_19 = arith.constant 8 : index
    %c0_20 = arith.constant 0 : index
    %76 = vector.load %arg3[%c8_19, %c0_20] : memref<16x128xf32, #tpu.memory_space<vmem>>, vector<8x128xf32>
    tpu.vector_store %arg3[%c8_19, %c0_20], %75 {strides = array<i32>} : memref<16x128xf32, #tpu.memory_space<vmem>>, vector<8x128xf32>,
    return
  }
  func.func @transform_0(%arg0: i32, %arg1: memref<1xi32, #tpu.memory_space<smem>>) -> (i32, i32) {
    %c0_i32 = arith.constant 0 : i32
    %c0_i32_0 = arith.constant 0 : i32
    return %arg0, %c0_i32 : i32, i32
  }
  func.func @transform_1(%arg0: i32, %arg1: memref<1xi32, #tpu.memory_space<smem>>) -> (i32, i32) {
    %c0_i32 = arith.constant 0 : i32
    %c0_i32_0 = arith.constant 0 : i32
    return %arg0, %c0_i32 : i32, i32
  }
}

</mosaic_0001>

<llo_original>
// kernel: tpu_custom_call.1
$region0: #{tpu_custom_call.1}
  #allocation0 [shape = 'u32[]', space=smem, size = 0x4, offset = 0x4, fixed_abs, tag = 'smem constant byte address 0x4 - core index']
  #allocation1 [shape = 'u32[144,128]{1,0:T(1,128)}', space=vmem, size = 0x12000, scoped, tag = 'internal scratch']
  #allocation2 [shape = 's32[1]{0}', space=sflag, size = 0x4, scoped, tag = 'scoped memory for tpu_custom_call.1']
  #allocation3 [shape = 's32[1]{0:T(128)S(6)}', space=smem, size = 0x200, scoped, tag = 'prefetched SMEM operand 0']
  %s0 = inlined_call_operand.<no memory space> [shape: s32[1], index: 0, kind: input, shape index: {}]
  %s1 = inlined_call_operand.hbm [shape: f32[16,128], index: 1, kind: input, shape index: {}]
  %s2 = inlined_call_operand.hbm [shape: f32[16,128], index: 2, kind: output, shape index: {}]
  %s3 = sld [smem:[#allocation0]]
  $region18: #{tpu_custom_call.1} parent=0
    _
  %s5 = ssub.s32 1, %s3
  %s6 = scalar_select 0, %s5, %s3
  %7 = sst [smem:[#allocation3]] %s0
  $region1: #{tpu_custom_call.1} parent=0
    #allocation4 [shape = 'u8[8192]{0}', space=vmem, size = 0x2000, scoped, tag = 'input window, operand 1, single buffered']
    #allocation5 [shape = 's32[1]{0}', space=sflag, size = 0x4, scoped, tag = 'scoped memory for tpu_custom_call.1']
    #allocation6 [shape = 's32[1]{0}', space=sflag, size = 0x4, scoped, tag = 'scoped memory for tpu_custom_call.1']
    #allocation7 [shape = 'u8[8192]{0}', space=vmem, size = 0x2000, scoped, tag = 'output window, operand 0, single buffered']
    %8 = vsyncpa [#allocation5], 0
    %9 = vsyncpa [#allocation6], 0
    // Predicated region
    $region2: #{tpu_custom_call.1} parent=1 // pred_check
      _
    $region3: #{tpu_custom_call.1} parent=1 // pred_check_branch
      %11 = sbr.rel (0) target = $region5
    $region4: #{tpu_custom_call.1} parent=1 // pred_region
      %s13 = ssub.s32 256, 256
      %14 = vsyncadd [#allocation5], %s13
      %s15 = sshll.u32 [#allocation4], 4
      %s16 = int_to_ptr.vmem [resolvable:$true] %s15
      %21 = dma.hbm_to_vmem [thread:$0]  %s1, 256, %s16, [#allocation5], 128, 128, 8
    $region5: #{tpu_custom_call.1} parent=1 // pred_fallthru
      _
    // Predicated region
    $region6: #{tpu_custom_call.1} parent=1 // pred_check
      _
    $region7: #{tpu_custom_call.1} parent=1 // pred_check_branch
      %23 = sbr.rel (0) target = $region9
    $region8: #{tpu_custom_call.1} parent=1 // pred_region
      %24 = dma.done [#allocation5], 256
    $region9: #{tpu_custom_call.1} parent=1 // pred_fallthru
      _
    %v25 = vlaneseq
    %v26 = vshrl.u32 %v25, 7
    %v27 = vlaneseq
    %v28 = vand.u32 %v27, 127
    %s29 = smul.u32 0, 1024
    %v30 = vmul.u32 %v26, 128
    %v31 = vstv %s29
    %v32 = vadd.s32 %v31, %v30
    %v33 = vadd.s32 %v32, %v28
    %s34 = sld [smem:[#allocation3]]
    %s35 = smul.u32 %s34, 2654435769
    %s36 = sadd.s32 %s35, 2135587861
    %v37 = vstv %s36
    %v38 = vxor.u32 %v33, %v37
    %v39 = vshrl.u32 %v38, 16
    %v40 = vxor.u32 %v38, %v39
    %v41 = vmul.u32 %v40, 2146121005
    %v42 = vshrl.u32 %v41, 15
    %v43 = vxor.u32 %v41, %v42
    %v44 = vmul.u32 %v43, 2221713035
    %v45 = vshrl.u32 %v44, 16
    %v46 = vxor.u32 %v44, %v45
    %v47 = vxor.u32 %v46, 2246822507
    %v48 = vshrl.u32 %v47, 16
    %v49 = vxor.u32 %v47, %v48
    %v50 = vmul.u32 %v49, 2146121005
    %v51 = vshrl.u32 %v50, 15
    %v52 = vxor.u32 %v50, %v51
    %v53 = vmul.u32 %v52, 2221713035
    %v54 = vshrl.u32 %v53, 16
    %v55 = vxor.u32 %v53, %v54
    %v56 = vshrl.u32 %v46, 9
    %v57 = vor.u32 %v56, 1065353216
    %v59 = vsub.f32 2.0, %v57
    %v60 = vshrl.u32 %v55, 9
    %v61 = vor.u32 %v60, 1065353216
    %v63 = vsub.f32 %v61, 1.0
    %v64 = vlog2.pop %v59
    %v65 = vmul.f32 %v64, 0.6931472
    %v66 = vmul.f32 %v65, -2.0
    %v67 = vrsqrt.pop %v66
    %v68 = vmul.f32 %v66, %v67
    %vm69 = vcmp.eq.f32.partialorder %v66, inf
    %v70 = vsel %vm69, %v66, %v68
    %vm71 = vcmp.eq.f32.partialorder %v66, 0.0
    %v72 = vand.u32 %v66, 2147483648
    %v73 = vsel %vm71, %v72, %v70
    %v74 = vmul.f32 %v73, 0.1
    %v75 = vmul.f32 %v63, 6.2831855
    %v76 = vld [vmem:[#allocation4] sm:$0xff]
    %v77 = vld [vmem:[#allocation4 + $0x8] sm:$0xff]
    %v78 = vand.u32 2147483647, %v75
    %vm79 = vcmp.le.f32.partialorder %v78, 0.7853982
    %vm80 = vcmp.lt.s32.totalorder %v75, 0
    %v81 = vand.u32 %v75, 2139095040
    %v82 = vshrl.u32 %v81, 23
    %v83 = vsub.s32 %v82, 127
    %v84 = vand.u32 2147483647, %v75
    %v85 = vand.u32 %v84, 8388607
    %v86 = vor.u32 %v85, 8388608
    %v87 = vsub.s32 0, %v86
    %v88 = vadd.s32 %v83, 1
    %vm89 = vcmp.gt.s32.totalorder %v88, 0
    %v90 = vsel %vm89, %v88, 0
    %v91 = vshrl.u32 %v90, 5
    %v92 = vand.u32 %v90, 31
    %v93 = vsub.s32 32, %v92
    %v94 = vshrl.u32 683565275, %v93
    %v95 = vshll.u32 683565275, %v92
    %v96 = vshrl.u32 2475754826, %v93
    %v97 = vor.u32 %v95, %v96
    %v98 = vshll.u32 2475754826, %v92
    %v99 = vshrl.u32 2131351028, %v93
    %v100 = vor.u32 %v98, %v99
    %v101 = vshll.u32 2131351028, %v92
    %v102 = vshrl.u32 2102212464, %v93
    %v103 = vor.u32 %v101, %v102
    %v104 = vshll.u32 2102212464, %v92
    %v105 = vshrl.u32 920167782, %v93
    %v106 = vor.u32 %v104, %v105
    %v107 = vshll.u32 920167782, %v92
    %v108 = vshrl.u32 1326507024, %v93
    %v109 = vor.u32 %v107, %v108
    %vm110 = vcmp.lt.s32.totalorder %v91, 1
    %vm111 = vcmp.lt.s32.totalorder %v91, 2
    %vm112 = vcmp.lt.s32.totalorder %v91, 3
    %vm113 = vcmp.lt.s32.totalorder %v91, 4
    %v114 = vsel %vm110, %v94, %v97
    %v115 = vsel %vm113, %v103, 2102212464
    %v116 = vsel %vm112, %v100, %v115
    %v117 = vsel %vm111, %v114, %v116
    %v118 = vsel %vm110, %v97, %v100
    %v119 = vsel %vm113, %v106, 920167782
    %v120 = vsel %vm112, %v103, %v119
    %v121 = vsel %vm111, %v118, %v120
    %v122 = vsel %vm110, %v100, %v103
    %v123 = vsel %vm113, %v109, 1326507024
    %v124 = vsel %vm112, %v106, %v123
    %v125 = vsel %vm111, %v122, %v124
    %v126 = vshll.u32 %v86, 8
    %v127 = vmul.u32.u64.compose %v126, %v125
    %v128 = vextract.low.u32 %v127
    %v129 = vextract.high.u32 %v127
    %v130 = vmul.u32.u64.compose %v126, %v121
    %v131 = vextract.low.u32 %v130
    %v132 = vextract.high.u32 %v130
    %v133 = vmul.u32 %v126, %v117
    %v134 = vadd.s32 %v129, %v131
    %vm135 = vc.u32 %v129, %v131
    %v136 = vadd.s32 %v132, 1
    %v137 = vsel %vm135, %v136, %v132
    %v138 = vadd.s32 %v133, %v137
    %v139 = vadd.s32 %v138, 536870912
    %v140 = vshrl.u32 %v139, 30
    %v141 = vshll.u32 %v140, 30
    %v142 = vsub.s32 %v138, %v141
    %vm143 = vcmp.lt.s32.totalorder %v142, 0
    %v144 = vsub.s32 0, %v142
    %v145 = vsel %vm143, %v144, %v142
    %v146 = vclz %v145
    %v147 = vsub.s32 %v146, 2
    %vm148 = vcmp.gt.s32.totalorder 0, %v147
    %v149 = vsel %vm148, 0, %v147
    %v150 = vsub.s32 32, %v149
    %v151 = vshll.u32 %v142, %v149
    %v152 = vshrl.u32 %v134, %v150
    %v153 = vor.u32 %v151, %v152
    %v154 = vsub.s32 4294967266, %v149
    %v155 = vadd.s32 %v154, 127
    %v156 = vshll.u32 %v155, 23
    %v157 = vor.u32 4788187, %v156
    %v158 = vand.u32 2147483647, %v157
    %v160 = vcvt.s32.f32 %v153
    %v161 = vmul.f32 %v160, %v158
    %v162 = vxor.u32 %v161, 2147483648
    %v163 = vsel %vm80, %v162, %v161
    %v164 = vsub.s32 4, %v140
    %v165 = vsel %vm80, %v164, %v140
    %v166 = vsel %vm79, %v75, %v163
    %v167 = vsel %vm79, 0, %v165
    %v168 = vcosq.f32.pop %v166
    %v169 = vsinq.f32.pop %v166
    %vm170 = vweird.f32 %v75
    %v171 = vand.u32 %v167, 3
    %vm172 = vcmp.lt.s32.totalorder %v171, 2
    %vm173 = vcmp.eq.s32.totalorder %v171, 0
    %v174 = vxor.u32 %v169, 2147483648
    %v175 = vsel %vm173, %v168, %v174
    %vm176 = vcmp.eq.s32.totalorder %v171, 2
    %v177 = vxor.u32 %v168, 2147483648
    %v178 = vsel %vm176, %v177, %v169
    %v179 = vsel %vm172, %v175, %v178
    %v180 = vsel %vm170, nan, %v179
    %v181 = vmul.f32 %v74, %v180
    %v182 = vadd.f32 %v181, 1.0
    %v183 = vmul.f32 %v76, %v182
    %184 = vst [vmem:[#allocation7] sm:$0xff] %v183
    %v185 = vand.u32 2147483647, %v75
    %vm186 = vcmp.le.f32.partialorder %v185, 0.7853982
    %vm187 = vcmp.lt.s32.totalorder %v75, 0
    %v188 = vand.u32 %v75, 2139095040
    %v189 = vshrl.u32 %v188, 23
    %v190 = vsub.s32 %v189, 127
    %v191 = vand.u32 2147483647, %v75
    %v192 = vand.u32 %v191, 8388607
    %v193 = vor.u32 %v192, 8388608
    %v194 = vsub.s32 0, %v193
    %v195 = vadd.s32 %v190, 1
    %vm196 = vcmp.gt.s32.totalorder %v195, 0
    %v197 = vsel %vm196, %v195, 0
    %v198 = vshrl.u32 %v197, 5
    %v199 = vand.u32 %v197, 31
    %v200 = vsub.s32 32, %v199
    %v201 = vshrl.u32 683565275, %v200
    %v202 = vshll.u32 683565275, %v199
    %v203 = vshrl.u32 2475754826, %v200
    %v204 = vor.u32 %v202, %v203
    %v205 = vshll.u32 2475754826, %v199
    %v206 = vshrl.u32 2131351028, %v200
    %v207 = vor.u32 %v205, %v206
    %v208 = vshll.u32 2131351028, %v199
    %v209 = vshrl.u32 2102212464, %v200
    %v210 = vor.u32 %v208, %v209
    %v211 = vshll.u32 2102212464, %v199
    %v212 = vshrl.u32 920167782, %v200
    %v213 = vor.u32 %v211, %v212
    %v214 = vshll.u32 920167782, %v199
    %v215 = vshrl.u32 1326507024, %v200
    %v216 = vor.u32 %v214, %v215
    %vm217 = vcmp.lt.s32.totalorder %v198, 1
    %vm218 = vcmp.lt.s32.totalorder %v198, 2
    %vm219 = vcmp.lt.s32.totalorder %v198, 3
    %vm220 = vcmp.lt.s32.totalorder %v198, 4
    %v221 = vsel %vm217, %v201, %v204
    %v222 = vsel %vm220, %v210, 2102212464
    %v223 = vsel %vm219, %v207, %v222
    %v224 = vsel %vm218, %v221, %v223
    %v225 = vsel %vm217, %v204, %v207
    %v226 = vsel %vm220, %v213, 920167782
    %v227 = vsel %vm219, %v210, %v226
    %v228 = vsel %vm218, %v225, %v227
    %v229 = vsel %vm217, %v207, %v210
    %v230 = vsel %vm220, %v216, 1326507024
    %v231 = vsel %vm219, %v213, %v230
    %v232 = vsel %vm218, %v229, %v231
    %v233 = vshll.u32 %v193, 8
    %v234 = vmul.u32.u64.compose %v233, %v232
    %v235 = vextract.low.u32 %v234
    %v236 = vextract.high.u32 %v234
    %v237 = vmul.u32.u64.compose %v233, %v228
    %v238 = vextract.low.u32 %v237
    %v239 = vextract.high.u32 %v237
    %v240 = vmul.u32 %v233, %v224
    %v241 = vadd.s32 %v236, %v238
    %vm242 = vc.u32 %v236, %v238
    %v243 = vadd.s32 %v239, 1
    %v244 = vsel %vm242, %v243, %v239
    %v245 = vadd.s32 %v240, %v244
    %v246 = vadd.s32 %v245, 536870912
    %v247 = vshrl.u32 %v246, 30
    %v248 = vshll.u32 %v247, 30
    %v249 = vsub.s32 %v245, %v248
    %vm250 = vcmp.lt.s32.totalorder %v249, 0
    %v251 = vsub.s32 0, %v249
    %v252 = vsel %vm250, %v251, %v249
    %v253 = vclz %v252
    %v254 = vsub.s32 %v253, 2
    %vm255 = vcmp.gt.s32.totalorder 0, %v254
    %v256 = vsel %vm255, 0, %v254
    %v257 = vsub.s32 32, %v256
    %v258 = vshll.u32 %v249, %v256
    %v259 = vshrl.u32 %v241, %v257
    %v260 = vor.u32 %v258, %v259
    %v261 = vsub.s32 4294967266, %v256
    %v262 = vadd.s32 %v261, 127
    %v263 = vshll.u32 %v262, 23
    %v264 = vor.u32 4788187, %v263
    %v265 = vand.u32 2147483647, %v264
    %v267 = vcvt.s32.f32 %v260
    %v268 = vmul.f32 %v267, %v265
    %v269 = vxor.u32 %v268, 2147483648
    %v270 = vsel %vm187, %v269, %v268
    %v271 = vsub.s32 4, %v247
    %v272 = vsel %vm187, %v271, %v247
    %v273 = vsel %vm186, %v75, %v270
    %v274 = vsel %vm186, 0, %v272
    %v275 = vcosq.f32.pop %v273
    %v276 = vsinq.f32.pop %v273
    %vm277 = vweird.f32 %v75
    %v278 = vadd.s32 %v274, 3
    %v279 = vand.u32 %v278, 3
    %vm280 = vcmp.lt.s32.totalorder %v279, 2
    %vm281 = vcmp.eq.s32.totalorder %v279, 0
    %v282 = vxor.u32 %v276, 2147483648
    %v283 = vsel %vm281, %v275, %v282
    %vm284 = vcmp.eq.s32.totalorder %v279, 2
    %v285 = vxor.u32 %v275, 2147483648
    %v286 = vsel %vm284, %v285, %v276
    %v287 = vsel %vm280, %v283, %v286
    %v288 = vsel %vm277, nan, %v287
    %v289 = vmul.f32 %v74, %v288
    %v290 = vadd.f32 %v289, 1.0
    %v291 = vmul.f32 %v77, %v290
    %292 = vst [vmem:[#allocation7 + $0x8] sm:$0xff] %v291
    // Predicated region
    $region10: #{tpu_custom_call.1} parent=1 // pred_check
      _
    $region11: #{tpu_custom_call.1} parent=1 // pred_check_branch
      %294 = sbr.rel (0) target = $region13
    $region12: #{tpu_custom_call.1} parent=1 // pred_region
      %s296 = ssub.s32 256, 256
      %297 = vsyncadd [#allocation6], %s296
      %s298 = sshll.u32 [#allocation7], 4
      %s299 = int_to_ptr.vmem [resolvable:$true] %s298
      %304 = dma.vmem_to_hbm [thread:$0]  %s299, 256, %s2, [#allocation6], 128, 128, 8
    $region13: #{tpu_custom_call.1} parent=1 // pred_fallthru
      _
    // Predicated region
    $region14: #{tpu_custom_call.1} parent=1 // pred_check
      _
    $region15: #{tpu_custom_call.1} parent=1 // pred_check_branch
      %306 = sbr.rel (0) target = $region17
    $region16: #{tpu_custom_call.1} parent=1 // pred_region
      %307 = dma.done [#allocation6], 256
    $region17: #{tpu_custom_call.1} parent=1 // pred_fallthru
      _
    %308 = vsyncpa [#allocation5], 1
    %309 = vsyncpa [#allocation6], 1

</llo_original>
